<compile_context>
chip_gen: v7x
topology: tpu7x:2x2x1
jax: 0.10.0
libtpu: 0.0.40
codegen_flags: <defaults>
</compile_context>

<pallas_src>
import math
import numpy as np

import jax
import jax.numpy as jnp
from jax.experimental import pallas as pl
from jax.experimental.pallas import tpu as pltpu

# ---------------- module hyper-parameters ----------------
SUBSAMPLING_FACTOR = 4
SAMPLING_NUM = int(math.log2(SUBSAMPLING_FACTOR))  # 2
FEAT_IN = 16
FEAT_OUT = 32
CONV_CHANNELS = 4
KERNEL = 3
STRIDE = 2
PAD = 1  # (kernel-1)//2, non-causal


def _conv_out_size(n: int) -> int:
    return (n + 2 * PAD - KERNEL) // STRIDE + 1


# ---------------- host-side (once) weight folding ----------------
def prepare_params(params):
    """Fold the 3x3/stride-2 convs into dense matmul matrices over the (feat, chan)
    axis and pre-transpose the Linear.  Runs once at parameter-prep time."""
    F = FEAT_IN
    Fo, Fo2 = _conv_out_size(F), _conv_out_size(_conv_out_size(F))
    Fp = F + 2 * PAD
    C = CONV_CHANNELS

    # conv0: h1[t1, co*Fo + f1] = sum_{kh,fp} xp[2*t1+kh, fp] * W0[kh*Fp+fp, co*Fo+f1]
    w0 = np.asarray(params["conv0_w"], np.float32)          # (C, 1, K, K)
    w0big = np.zeros((KERNEL * Fp, C * Fo), np.float32)
    for co in range(C):
        for kh in range(KERNEL):
            for kw in range(KERNEL):
                for f1 in range(Fo):
                    w0big[kh * Fp + 2 * f1 + kw, co * Fo + f1] = w0[co, 0, kh, kw]

    # conv1 tap kh: contribution of h1 row (2*t2+kh-1) -> h2[t2, c2*Fo2 + f2]
    w1 = np.asarray(params["conv1_w"], np.float32)           # (C, C, K, K)
    w1stk = np.zeros((KERNEL, C * Fo, C * Fo2), np.float32)
    for kh in range(KERNEL):
        for c2 in range(C):
            for co in range(C):
                for kw in range(KERNEL):
                    for f2 in range(Fo2):
                        f1 = 2 * f2 + kw - 1
                        if 0 <= f1 < Fo:
                            w1stk[kh, co * Fo + f1, c2 * Fo2 + f2] = w1[c2, co, kh, kw]

    return {
        "w0": jnp.asarray(w0big),                                                # (3*Fp, C*Fo)
        "b0": jnp.asarray(np.repeat(np.asarray(params["conv0_b"], np.float32), Fo)[None, :]),
        "w1": jnp.asarray(w1stk),                                                # (3, C*Fo, C*Fo2)
        "b1": jnp.asarray(np.repeat(np.asarray(params["conv1_b"], np.float32), Fo2)[None, :]),
        "wout": jnp.asarray(np.asarray(params["out_w"], np.float32).T),          # (C*Fo2, FEAT_OUT)
        "bout": jnp.asarray(np.asarray(params["out_b"], np.float32)[None, :]),   # (1, FEAT_OUT)
    }


# ---------------- fused Pallas kernel ----------------
def _fused_kernel(x_ref,                         # (2*M, 3*Fp)  even|odd conv0 input rows
                  m_ref,                         # (4*M, 1)     {0,1} masks: h1e|h1o|h2|shift
                  w0_ref, b0_ref,                # folded conv0
                  w1_ref, b1_ref,                # folded conv1 taps (3, C*Fo, C*Fo2)
                  wout_ref, bout_ref,            # final Linear
                  o_ref,                         # (M, FEAT_OUT)
                  prev_ref):                     # VMEM scratch (M, C*Fo)
    two_m = x_ref.shape[0]                       # 2 * Bblk * To2
    m_rows = two_m // 2                          # Bblk * To2
    nc1 = w0_ref.shape[1]                        # C * Fo

    # ---- conv0 (+bias, ReLU): even + odd rows of every batch in the block, ONE matmul
    h1 = jnp.dot(x_ref[...], w0_ref[...], preferred_element_type=jnp.float32)
    h1 = jnp.maximum(h1 + b0_ref[...], 0.0)
    # post-conv0 time mask (per-batch sub-sampled lengths, baked into host mask rows)
    h1 = h1 * m_ref[pl.ds(0, two_m), :]

    h1e = h1[0:m_rows, :]                        # h1[2*t]   rows, batch-major
    h1o = h1[m_rows:two_m, :]                    # h1[2*t+1] rows, batch-major

    # ---- h1[2*t-1] rows: shift h1o down by one row via a tiny VMEM scratch; the conv1
    # zero-padding row (t == 0) and batch-boundary rows are killed by the shift mask.
    prev_ref[pl.ds(0, 1), :] = jnp.zeros((1, nc1), jnp.float32)
    if m_rows > 1:
        prev_ref[pl.ds(1, m_rows - 1), :] = h1o[0:m_rows - 1, :]
    h1o_prev = prev_ref[...] * m_ref[pl.ds(3 * m_rows, m_rows), :]

    # ---- conv1 (three folded taps) + bias + ReLU + time mask ----
    acc = jnp.dot(h1o_prev, w1_ref[0], preferred_element_type=jnp.float32)
    acc = acc + jnp.dot(h1e, w1_ref[1], preferred_element_type=jnp.float32)
    acc = acc + jnp.dot(h1o, w1_ref[2], preferred_element_type=jnp.float32)
    h2 = jnp.maximum(acc + b1_ref[...], 0.0)
    h2 = h2 * m_ref[pl.ds(2 * m_rows, m_rows), :]

    # ---- output Linear ----
    out = jnp.dot(h2, wout_ref[...], preferred_element_type=jnp.float32) + bout_ref[...]
    o_ref[...] = out.astype(o_ref.dtype)


def _pick_block_batch(B, To2):
    # ~512 conv0 rows per grid step, but keep >= 2 grid steps so both v7x TCs get work.
    bblk = max(1, 512 // max(2, 2 * To2))
    if B >= 2:
        bblk = min(bblk, B // 2)
    return max(1, min(bblk, B))


# ---------------- wrapper ----------------
def conv_subsampling_forward(x, lengths, pp, *, block_batch=None):
    """x: (B, T, feat_in) f32, lengths: (B,) int -> ((B, T//4, feat_out), out_lengths)."""
    B, T, F = x.shape
    assert F == FEAT_IN
    Fo = _conv_out_size(F)
    Fo2 = _conv_out_size(Fo)
    To2 = _conv_out_size(_conv_out_size(T))
    Fp = F + 2 * PAD
    C = CONV_CHANNELS
    K0 = KERNEL * Fp
    NC1 = C * Fo
    NC2 = C * Fo2

    # integer length recurrence (== floor-based calc_length for non-negative lengths)
    l0 = lengths.astype(jnp.int32)
    l1 = (l0 + 2 * PAD - KERNEL) // STRIDE + 1
    l2 = (l1 + 2 * PAD - KERNEL) // STRIDE + 1

    Bblk = int(block_batch) if block_batch else _pick_block_batch(B, To2)
    nsteps = (B + Bblk - 1) // Bblk
    Bpad = nsteps * Bblk
    M = Bblk * To2

    xb, l0p, l1p, l2p = x, l0, l1, l2
    if Bpad != B:
        xb = jnp.pad(x, ((0, Bpad - B), (0, 0), (0, 0)))
        l0p = jnp.pad(l0, (0, Bpad - B))
        l1p = jnp.pad(l1, (0, Bpad - B))
        l2p = jnp.pad(l2, (0, Bpad - B))

    # Input-side time mask (MaskedConvSequential masks x before conv0), fused by XLA
    # with the conv zero padding + phase-split gather below (layout-only glue).
    mask0 = (jnp.arange(T, dtype=jnp.int32)[None, :] < l0p[:, None]).astype(xb.dtype)
    xm = xb * mask0[:, :, None]
    Tp = max(T + 2 * PAD, 4 * To2 + 1)
    xp = jnp.pad(xm, ((0, 0), (PAD, Tp - T - PAD), (PAD, PAD)))        # (Bpad, Tp, Fp)

    # Stride-4 row phase split: padded rows feeding even / odd conv0 output time rows.
    xe = jnp.concatenate([xp[:, kh::4, :][:, :To2, :] for kh in range(KERNEL)], axis=-1)
    xo = jnp.concatenate([xp[:, kh + 2::4, :][:, :To2, :] for kh in range(KERNEL)], axis=-1)
    # per grid step row layout: [even rows (batch-major), odd rows (batch-major)]
    x_stk = jnp.stack([xe.reshape(nsteps, Bblk, To2, K0),
                       xo.reshape(nsteps, Bblk, To2, K0)], axis=1)
    x_stk = x_stk.reshape(nsteps, 2 * M, K0)

    # Tiny per-batch {0,1} time-mask rows: [h1 even | h1 odd | h2 | conv1-shift kill]
    t_idx = jnp.arange(To2, dtype=jnp.int32)
    m_e = (2 * t_idx[None, :] < l1p[:, None]).astype(xb.dtype)          # (Bpad, To2)
    m_o = (2 * t_idx[None, :] + 1 < l1p[:, None]).astype(xb.dtype)
    m_2 = (t_idx[None, :] < l2p[:, None]).astype(xb.dtype)
    m_s = jnp.broadcast_to((t_idx > 0).astype(xb.dtype)[None, :], (Bpad, To2))
    m_h1 = jnp.stack([m_e.reshape(nsteps, Bblk, To2),
                      m_o.reshape(nsteps, Bblk, To2)], axis=1).reshape(nsteps, 2 * M)
    masks = jnp.concatenate([m_h1,
                             m_2.reshape(nsteps, M),
                             m_s.reshape(nsteps, M)], axis=1)[..., None]  # (nsteps, 4M, 1)

    out = pl.pallas_call(
        _fused_kernel,
        out_shape=jax.ShapeDtypeStruct((nsteps, M, FEAT_OUT), x.dtype),
        grid=(nsteps,),
        in_specs=[
            pl.BlockSpec((None, 2 * M, K0), lambda i: (i, 0, 0)),
            pl.BlockSpec((None, 4 * M, 1), lambda i: (i, 0, 0)),
            pl.BlockSpec((K0, NC1), lambda i: (0, 0)),
            pl.BlockSpec((1, NC1), lambda i: (0, 0)),
            pl.BlockSpec((KERNEL, NC1, NC2), lambda i: (0, 0, 0)),
            pl.BlockSpec((1, NC2), lambda i: (0, 0)),
            pl.BlockSpec((NC2, FEAT_OUT), lambda i: (0, 0)),
            pl.BlockSpec((1, FEAT_OUT), lambda i: (0, 0)),
        ],
        out_specs=pl.BlockSpec((None, M, FEAT_OUT), lambda i: (i, 0, 0)),
        scratch_shapes=[pltpu.VMEM((M, NC1), jnp.float32)],
        compiler_params=pltpu.CompilerParams(
            dimension_semantics=("parallel",),      # batch-block axis across TCs (v7x)
            vmem_limit_bytes=32 * 1024 * 1024,
        ),
    )(x_stk, masks, pp["w0"], pp["b0"], pp["w1"], pp["b1"], pp["wout"], pp["bout"])

    out = out.reshape(Bpad, To2, FEAT_OUT)[:B]
    return out, l2


# ---------------- pure-JAX reference (for verification) ----------------
def _next_length(l_float):
    return jnp.floor((l_float + 2 * PAD - KERNEL) / STRIDE + 1.0)


def _time_mask(l_float, t, dtype):
    return (jnp.arange(t)[None, :] < l_float[:, None]).astype(dtype)


def _ref_forward(x, lengths, params):
    B, T, F = x.shape
    l = lengths.astype(jnp.float32)
    m = _time_mask(l, T, x.dtype)
    h = (x * m[:, :, None])[:, None, :, :]  # NCHW (B, 1, T, F)
    for i in range(SAMPLING_NUM):
        w, b = params[f"conv{i}_w"], params[f"conv{i}_b"]
        h = jax.lax.conv_general_dilated(
            h, w, (STRIDE, STRIDE), ((PAD, PAD), (PAD, PAD)),
            dimension_numbers=("NCHW", "OIHW", "NCHW"))
        h = jnp.maximum(h + b[None, :, None, None], 0.0)
        l = _next_length(l)
        m = _time_mask(l, h.shape[2], x.dtype)
        h = h * m[:, None, :, None]
    B_, C, To, Fo = h.shape
    flat = jnp.transpose(h, (0, 2, 1, 3)).reshape(B_, To, C * Fo)
    out = flat @ params["out_w"].T + params["out_b"]
    return out, l.astype(jnp.int32)


# TODO(synk): the vggnet / dw_striding / conv1d variants, causal padding and the
# conv_split_by_batch / conv_split_by_channel chunking heuristics of the PyTorch module
# are not exercised by the default 'striding' x4 non-causal config and are not implemented.

if __name__ == "__main__":
    key = jax.random.PRNGKey(0)
    kx, k0w, k0b, k1w, k1b, kow, kob = jax.random.split(key, 7)

    B, T = 2, 16
    x = jax.random.normal(kx, (B, T, FEAT_IN), dtype=jnp.float32)
    lengths = jnp.array([16, 11], dtype=jnp.int32)

    out_feat = FEAT_IN
    for _ in range(SAMPLING_NUM):
        out_feat = _conv_out_size(out_feat)
    lin_in = CONV_CHANNELS * out_feat  # Linear(conv_channels * out_length, feat_out)

    params = {
        "conv0_w": 0.1 * jax.random.normal(k0w, (CONV_CHANNELS, 1, KERNEL, KERNEL), jnp.float32),
        "conv0_b": 0.1 * jax.random.normal(k0b, (CONV_CHANNELS,), jnp.float32),
        "conv1_w": 0.1 * jax.random.normal(k1w, (CONV_CHANNELS, CONV_CHANNELS, KERNEL, KERNEL), jnp.float32),
        "conv1_b": 0.1 * jax.random.normal(k1b, (CONV_CHANNELS,), jnp.float32),
        "out_w": 0.1 * jax.random.normal(kow, (FEAT_OUT, lin_in), jnp.float32),
        "out_b": 0.1 * jax.random.normal(kob, (FEAT_OUT,), jnp.float32),
    }

    pp = prepare_params(params)  # one-time weight folding (host-side)

    fwd = jax.jit(conv_subsampling_forward)
    out, out_len = fwd(x, lengths, pp)
    out = jax.block_until_ready(out)
    out_len = jax.block_until_ready(out_len)

    ref_out, ref_len = _ref_forward(x, lengths, params)
    assert out.shape == (B, T // SUBSAMPLING_FACTOR, FEAT_OUT), out.shape
    err = float(jnp.max(jnp.abs(out - ref_out)))
    assert jnp.allclose(out, ref_out, rtol=5e-4, atol=5e-4), err
    assert jnp.array_equal(out_len, ref_len), (out_len, ref_len)
    print("KERNEL_OK")
</pallas_src>

<mosaic_0001>
module attributes {stable_mosaic.version = 11 : i64} {
  func.func @_fused_kernel(%arg0: i32, %arg1: memref<1x8x54xf32, #tpu.memory_space<vmem>>, %arg2: memref<1x16x1xf32, #tpu.memory_space<vmem>>, %arg3: memref<54x32xf32, #tpu.memory_space<vmem>>, %arg4: memref<1x32xf32, #tpu.memory_space<vmem>>, %arg5: memref<3x32x16xf32, #tpu.memory_space<vmem>>, %arg6: memref<1x16xf32, #tpu.memory_space<vmem>>, %arg7: memref<16x32xf32, #tpu.memory_space<vmem>>, %arg8: memref<1x32xf32, #tpu.memory_space<vmem>>, %arg9: memref<1x4x32xf32, #tpu.memory_space<vmem>>, %arg10: memref<4x32xf32, #tpu.memory_space<vmem>>) attributes {dimension_semantics = [#tpu.dimension_semantics<parallel>], iteration_bounds = array<i64: 2>, scalar_prefetch = 0 : i64, scratch_operands = 1 : i64, tpu.core_type = #tpu.core_type<tc>, window_params = [{transform_indices = @transform_0, window_bounds = array<i64: 1, 8, 54>}, {transform_indices = @transform_1, window_bounds = array<i64: 1, 16, 1>}, {pipeline_mode = #tpu.pipeline_mode<synchronous>, transform_indices = @transform_2, window_bounds = array<i64: 54, 32>}, {pipeline_mode = #tpu.pipeline_mode<synchronous>, transform_indices = @transform_3, window_bounds = array<i64: 1, 32>}, {pipeline_mode = #tpu.pipeline_mode<synchronous>, transform_indices = @transform_4, window_bounds = array<i64: 3, 32, 16>}, {pipeline_mode = #tpu.pipeline_mode<synchronous>, transform_indices = @transform_5, window_bounds = array<i64: 1, 16>}, {pipeline_mode = #tpu.pipeline_mode<synchronous>, transform_indices = @transform_6, window_bounds = array<i64: 16, 32>}, {pipeline_mode = #tpu.pipeline_mode<synchronous>, transform_indices = @transform_7, window_bounds = array<i64: 1, 32>}, {transform_indices = @transform_8, window_bounds = array<i64: 1, 4, 32>}]} {
    %c0 = arith.constant 0 : index
    %c0_0 = arith.constant 0 : index
    %c0_1 = arith.constant 0 : index
    %0 = vector.load %arg1[%c0, %c0_0, %c0_1] : memref<1x8x54xf32, #tpu.memory_space<vmem>>, vector<1x8x54xf32>
    %1 = vector.shape_cast %0 : vector<1x8x54xf32> to vector<8x54xf32>
    %c0_2 = arith.constant 0 : index
    %c0_3 = arith.constant 0 : index
    %2 = vector.load %arg3[%c0_2, %c0_3] : memref<54x32xf32, #tpu.memory_space<vmem>>, vector<54x32xf32>
    %cst = arith.constant dense<0.000000e+00> : vector<8x32xf32>
    %3 = tpu.matmul %1, %2, %cst {dimension_numbers = #tpu.dot_dimension_numbers<[1], [0], [0], [1], [0, 0, 1, 1], [], []>} : vector<8x54xf32>, vector<54x32xf32>, vector<8x32xf32> -> vector<8x32xf32>
    %c0_4 = arith.constant 0 : index
    %c0_5 = arith.constant 0 : index
    %4 = vector.load %arg4[%c0_4, %c0_5] : memref<1x32xf32, #tpu.memory_space<vmem>>, vector<1x32xf32>
    %5 = vector.broadcast %4 : vector<1x32xf32> to vector<8x32xf32>
    %6 = arith.addf %3, %5 : vector<8x32xf32>
    %cst_6 = arith.constant 0.000000e+00 : f32
    %7 = vector.broadcast %cst_6 : f32 to vector<8x32xf32>
    %8 = arith.maximumf %6, %7 : vector<8x32xf32>
    %c0_7 = arith.constant 0 : index
    %c0_8 = arith.constant 0 : index
    %c0_9 = arith.constant 0 : index
    %9 = vector.load %arg2[%c0_7, %c0_8, %c0_9] : memref<1x16x1xf32, #tpu.memory_space<vmem>>, vector<1x8x1xf32>
    %10 = vector.shape_cast %9 : vector<1x8x1xf32> to vector<8x1xf32>
    %11 = vector.broadcast %10 : vector<8x1xf32> to vector<8x32xf32>
    %12 = arith.mulf %8, %11 : vector<8x32xf32>
    %13 = vector.extract_strided_slice %12 {offsets = [0, 0], sizes = [4, 32], strides = [1, 1]} : vector<8x32xf32> to vector<4x32xf32>
    %14 = vector.extract_strided_slice %12 {offsets = [4, 0], sizes = [4, 32], strides = [1, 1]} : vector<8x32xf32> to vector<4x32xf32>
    %cst_10 = arith.constant 0.000000e+00 : f32
    %15 = vector.broadcast %cst_10 : f32 to vector<1x32xf32>
    %c0_11 = arith.constant 0 : index
    %c0_12 = arith.constant 0 : index
    %16 = vector.load %arg10[%c0_11, %c0_12] : memref<4x32xf32, #tpu.memory_space<vmem>>, vector<1x32xf32>
    tpu.vector_store %arg10[%c0_11, %c0_12], %15 {strides = array<i32>} : memref<4x32xf32, #tpu.memory_space<vmem>>, vector<1x32xf32>,
    %17 = vector.extract_strided_slice %14 {offsets = [0, 0], sizes = [3, 32], strides = [1, 1]} : vector<4x32xf32> to vector<3x32xf32>
    %c1 = arith.constant 1 : index
    %c0_13 = arith.constant 0 : index
    %18 = vector.load %arg10[%c1, %c0_13] : memref<4x32xf32, #tpu.memory_space<vmem>>, vector<3x32xf32>
    tpu.vector_store %arg10[%c1, %c0_13], %17 {strides = array<i32>} : memref<4x32xf32, #tpu.memory_space<vmem>>, vector<3x32xf32>,
    %c0_14 = arith.constant 0 : index
    %c0_15 = arith.constant 0 : index
    %19 = vector.load %arg10[%c0_14, %c0_15] : memref<4x32xf32, #tpu.memory_space<vmem>>, vector<4x32xf32>
    %c0_16 = arith.constant 0 : index
    %c12 = arith.constant 12 : index
    %c0_17 = arith.constant 0 : index
    %20 = vector.load %arg2[%c0_16, %c12, %c0_17] : memref<1x16x1xf32, #tpu.memory_space<vmem>>, vector<1x4x1xf32>
    %21 = vector.shape_cast %20 : vector<1x4x1xf32> to vector<4x1xf32>
    %22 = vector.broadcast %21 : vector<4x1xf32> to vector<4x32xf32>
    %23 = arith.mulf %19, %22 : vector<4x32xf32>
    %c0_18 = arith.constant 0 : index
    %c0_19 = arith.constant 0 : index
    %c0_20 = arith.constant 0 : index
    %24 = vector.load %arg5[%c0_18, %c0_19, %c0_20] : memref<3x32x16xf32, #tpu.memory_space<vmem>>, vector<1x32x16xf32>
    %25 = vector.shape_cast %24 : vector<1x32x16xf32> to vector<32x16xf32>
    %cst_21 = arith.constant dense<0.000000e+00> : vector<4x16xf32>
    %26 = tpu.matmul %23, %25, %cst_21 {dimension_numbers = #tpu.dot_dimension_numbers<[1], [0], [0], [1], [0, 0, 1, 1], [], []>} : vector<4x32xf32>, vector<32x16xf32>, vector<4x16xf32> -> vector<4x16xf32>
    %c1_22 = arith.constant 1 : index
    %c0_23 = arith.constant 0 : index
    %c0_24 = arith.constant 0 : index
    %27 = vector.load %arg5[%c1_22, %c0_23, %c0_24] : memref<3x32x16xf32, #tpu.memory_space<vmem>>, vector<1x32x16xf32>
    %28 = vector.shape_cast %27 : vector<1x32x16xf32> to vector<32x16xf32>
    %cst_25 = arith.constant dense<0.000000e+00> : vector<4x16xf32>
    %29 = tpu.matmul %13, %28, %cst_25 {dimension_numbers = #tpu.dot_dimension_numbers<[1], [0], [0], [1], [0, 0, 1, 1], [], []>} : vector<4x32xf32>, vector<32x16xf32>, vector<4x16xf32> -> vector<4x16xf32>
    %30 = arith.addf %26, %29 : vector<4x16xf32>
    %c2 = arith.constant 2 : index
    %c0_26 = arith.constant 0 : index
    %c0_27 = arith.constant 0 : index
    %31 = vector.load %arg5[%c2, %c0_26, %c0_27] : memref<3x32x16xf32, #tpu.memory_space<vmem>>, vector<1x32x16xf32>
    %32 = vector.shape_cast %31 : vector<1x32x16xf32> to vector<32x16xf32>
    %cst_28 = arith.constant dense<0.000000e+00> : vector<4x16xf32>
    %33 = tpu.matmul %14, %32, %cst_28 {dimension_numbers = #tpu.dot_dimension_numbers<[1], [0], [0], [1], [0, 0, 1, 1], [], []>} : vector<4x32xf32>, vector<32x16xf32>, vector<4x16xf32> -> vector<4x16xf32>
    %34 = arith.addf %30, %33 : vector<4x16xf32>
    %c0_29 = arith.constant 0 : index
    %c0_30 = arith.constant 0 : index
    %35 = vector.load %arg6[%c0_29, %c0_30] : memref<1x16xf32, #tpu.memory_space<vmem>>, vector<1x16xf32>
    %36 = vector.broadcast %35 : vector<1x16xf32> to vector<4x16xf32>
    %37 = arith.addf %34, %36 : vector<4x16xf32>
    %cst_31 = arith.constant 0.000000e+00 : f32
    %38 = vector.broadcast %cst_31 : f32 to vector<4x16xf32>
    %39 = arith.maximumf %37, %38 : vector<4x16xf32>
    %c0_32 = arith.constant 0 : index
    %c8 = arith.constant 8 : index
    %c0_33 = arith.constant 0 : index
    %40 = vector.load %arg2[%c0_32, %c8, %c0_33] : memref<1x16x1xf32, #tpu.memory_space<vmem>>, vector<1x4x1xf32>
    %41 = vector.shape_cast %40 : vector<1x4x1xf32> to vector<4x1xf32>
    %42 = vector.broadcast %41 : vector<4x1xf32> to vector<4x16xf32>
    %43 = arith.mulf %39, %42 : vector<4x16xf32>
    %c0_34 = arith.constant 0 : index
    %c0_35 = arith.constant 0 : index
    %44 = vector.load %arg7[%c0_34, %c0_35] : memref<16x32xf32, #tpu.memory_space<vmem>>, vector<16x32xf32>
    %cst_36 = arith.constant dense<0.000000e+00> : vector<4x32xf32>
    %45 = tpu.matmul %43, %44, %cst_36 {dimension_numbers = #tpu.dot_dimension_numbers<[1], [0], [0], [1], [0, 0, 1, 1], [], []>} : vector<4x16xf32>, vector<16x32xf32>, vector<4x32xf32> -> vector<4x32xf32>
    %c0_37 = arith.constant 0 : index
    %c0_38 = arith.constant 0 : index
    %46 = vector.load %arg8[%c0_37, %c0_38] : memref<1x32xf32, #tpu.memory_space<vmem>>, vector<1x32xf32>
    %47 = vector.broadcast %46 : vector<1x32xf32> to vector<4x32xf32>
    %48 = arith.addf %45, %47 : vector<4x32xf32>
    %c0_39 = arith.constant 0 : index
    %c0_40 = arith.constant 0 : index
    %c0_41 = arith.constant 0 : index
    %49 = vector.load %arg9[%c0_39, %c0_40, %c0_41] : memref<1x4x32xf32, #tpu.memory_space<vmem>>, vector<1x4x32xf32>
    %50 = vector.shape_cast %49 : vector<1x4x32xf32> to vector<4x32xf32>
    %51 = vector.shape_cast %48 : vector<4x32xf32> to vector<1x4x32xf32>
    tpu.vector_store %arg9[%c0_39, %c0_40, %c0_41], %51 {strides = array<i32>} : memref<1x4x32xf32, #tpu.memory_space<vmem>>, vector<1x4x32xf32>,
    return
  }
  func.func @transform_0(%arg0: i32) -> (i32, i32, i32) {
    %c0_i32 = arith.constant 0 : i32
    %c0_i32_0 = arith.constant 0 : i32
    %c0_i32_1 = arith.constant 0 : i32
    return %arg0, %c0_i32, %c0_i32_0 : i32, i32, i32
  }
  func.func @transform_1(%arg0: i32) -> (i32, i32, i32) {
    %c0_i32 = arith.constant 0 : i32
    %c0_i32_0 = arith.constant 0 : i32
    %c0_i32_1 = arith.constant 0 : i32
    return %arg0, %c0_i32, %c0_i32_0 : i32, i32, i32
  }
  func.func @transform_2(%arg0: i32) -> (i32, i32) {
    %c0_i32 = arith.constant 0 : i32
    %c0_i32_0 = arith.constant 0 : i32
    %c0_i32_1 = arith.constant 0 : i32
    return %c0_i32, %c0_i32_0 : i32, i32
  }
  func.func @transform_3(%arg0: i32) -> (i32, i32) {
    %c0_i32 = arith.constant 0 : i32
    %c0_i32_0 = arith.constant 0 : i32
    %c0_i32_1 = arith.constant 0 : i32
    return %c0_i32, %c0_i32_0 : i32, i32
  }
  func.func @transform_4(%arg0: i32) -> (i32, i32, i32) {
    %c0_i32 = arith.constant 0 : i32
    %c0_i32_0 = arith.constant 0 : i32
    %c0_i32_1 = arith.constant 0 : i32
    %c0_i32_2 = arith.constant 0 : i32
    return %c0_i32, %c0_i32_0, %c0_i32_1 : i32, i32, i32
  }
  func.func @transform_5(%arg0: i32) -> (i32, i32) {
    %c0_i32 = arith.constant 0 : i32
    %c0_i32_0 = arith.constant 0 : i32
    %c0_i32_1 = arith.constant 0 : i32
    return %c0_i32, %c0_i32_0 : i32, i32
  }
  func.func @transform_6(%arg0: i32) -> (i32, i32) {
    %c0_i32 = arith.constant 0 : i32
    %c0_i32_0 = arith.constant 0 : i32
    %c0_i32_1 = arith.constant 0 : i32
    return %c0_i32, %c0_i32_0 : i32, i32
  }
  func.func @transform_7(%arg0: i32) -> (i32, i32) {
    %c0_i32 = arith.constant 0 : i32
    %c0_i32_0 = arith.constant 0 : i32
    %c0_i32_1 = arith.constant 0 : i32
    return %c0_i32, %c0_i32_0 : i32, i32
  }
  func.func @transform_8(%arg0: i32) -> (i32, i32, i32) {
    %c0_i32 = arith.constant 0 : i32
    %c0_i32_0 = arith.constant 0 : i32
    %c0_i32_1 = arith.constant 0 : i32
    return %arg0, %c0_i32, %c0_i32_0 : i32, i32, i32
  }
}

</mosaic_0001>

<llo_original>
// kernel: conv_subsampling_forward.1
$region0: #{conv_subsampling_forward.1}
  #allocation0 [shape = 'u32[]', space=smem, size = 0x4, offset = 0x4, fixed_abs, tag = 'smem constant byte address 0x4 - core index']
  #allocation1 [shape = 'u32[144,128]{1,0:T(1,128)}', space=vmem, size = 0x12000, scoped, tag = 'internal scratch']
  #allocation2 [shape = 'f32[4,32]{1,0:T(4,128)}', space=vmem, size = 0x800, scoped, tag = 'scratch operand']
  %s0 = inlined_call_operand.vmem [shape: f32[2,8,54], index: 0, kind: input, shape index: {}]
  %s1 = inlined_call_operand.vmem [shape: f32[2,16,1], index: 1, kind: input, shape index: {}]
  %s2 = inlined_call_operand.vmem [shape: f32[54,32], index: 2, kind: input, shape index: {}]
  %s3 = inlined_call_operand.vmem [shape: f32[1,32], index: 3, kind: input, shape index: {}]
  %s4 = inlined_call_operand.vmem [shape: f32[3,32,16], index: 4, kind: input, shape index: {}]
  %s5 = inlined_call_operand.vmem [shape: f32[1,16], index: 5, kind: input, shape index: {}]
  %s6 = inlined_call_operand.vmem [shape: f32[16,32], index: 6, kind: input, shape index: {}]
  %s7 = inlined_call_operand.vmem [shape: f32[1,32], index: 7, kind: input, shape index: {}]
  %s8 = inlined_call_operand.hbm [shape: f32[2,4,32], index: 8, kind: output, shape index: {}]
  %s9 = sld [smem:[#allocation0]]
  $region65: #{conv_subsampling_forward.1} parent=0
    _
  %s11 = ssub.s32 1, %s9
  %s12 = scalar_select 0, %s11, %s9
  $region1: #{conv_subsampling_forward.1} parent=0
    #allocation3 [shape = 'u8[4096]{0}', space=vmem, size = 0x1000, scoped, tag = 'output window, operand 0']
    #allocation4 [shape = 's32[2]{0}', space=sflag, size = 0x8, scoped, tag = 'scoped memory for conv_subsampling_forward.1']
    %13 = vsyncpa [#allocation4], 0
    %s14 = scalar_lea.sflag [#allocation4], 1
    %15 = vsyncpa %s14, 0
    loop: start=0, step=1, limit=4
    $region2: #{conv_subsampling_forward.1} parent=1 // loop_pre_header
      _
    $region3: #{conv_subsampling_forward.1} parent=1 // loop_header
      %s17 = sphi 0, %s21
      %p18 = scmp.ge.s32.totalorder %s17, 4
      %s27 = sphi 0, %s29
      %s30 = sphi 0, %s27
      %s31 = sphi 0, %s30
      %s47 = sphi 0, %s31
      %s53 = sphi 0, %s55
      %s56 = sphi 0, %s53
      %s57 = sphi 0, %s56
      %s73 = sphi 0, %s57
      %s77 = sphi 0, %s77
      %s79 = sphi 0, %s77
      %s80 = sphi 0, %s79
      %s94 = sphi 0, %s80
      %s98 = sphi 0, %s98
      %s100 = sphi 0, %s98
      %s101 = sphi 0, %s100
      %s115 = sphi 0, %s101
      %s119 = sphi 0, %s119
      %s121 = sphi 0, %s119
      %s122 = sphi 0, %s121
      %s136 = sphi 0, %s122
      %s140 = sphi 0, %s140
      %s142 = sphi 0, %s140
      %s143 = sphi 0, %s142
      %s157 = sphi 0, %s143
      %s161 = sphi 0, %s161
      %s163 = sphi 0, %s161
      %s164 = sphi 0, %s163
      %s178 = sphi 0, %s164
      %s182 = sphi 0, %s182
      %s184 = sphi 0, %s182
      %s185 = sphi 0, %s184
      %s199 = sphi 0, %s185
      %s205 = sphi 0, %s207
      %s208 = sphi 0, %s205
      %s209 = sphi 0, %s208
      %s225 = sphi 0, %s209
    $region4: #{conv_subsampling_forward.1} parent=1 // loop_header_branch
      %20 = sbr.rel (%p18) target = $region8
    $region5: #{conv_subsampling_forward.1} parent=1 // loop_body
      %s22 = ssub.s32 %s17, 1
      %s23 = ssub.s32 %s17, 2
      %s24 = sadd.s32 %s17, 1
      %s25 = ssub.s32 %s17, %s24
      %p26 = scmp.eq.s32.totalorder %s25, 0
      %s28 = sadd.s32 %s27, 1
      %s29 = scalar_select %p26, %s27, %s28
      %p32 = pneg %p26
      %p33 = scmp.eq.s32.totalorder %s17, 1
      %p34 = por %p32, %p33
      %p35 = scmp.ne.s32.totalorder %s27, %s30
      %p36 = scmp.eq.s32.totalorder %s17, 0
      %p37 = por %p35, %p36
      %p38 = scmp.ne.s32.totalorder %s27, %s30
      %p39 = scmp.eq.s32.totalorder %s22, 1
      %p40 = por %p38, %p39
      %p41 = scmp.ne.s32.totalorder %s30, %s31
      %p42 = scmp.eq.s32.totalorder %s22, 0
      %p43 = por %p41, %p42
      %p44 = scmp.ne.s32.totalorder %s30, %s31
      %p45 = scmp.eq.s32.totalorder %s23, 1
      %p46 = por %p44, %p45
      %p48 = scmp.ne.s32.totalorder %s31, %s47
      %p49 = scmp.eq.s32.totalorder %s23, 0
      %p50 = por %p48, %p49
      %s51 = ssub.s32 %s17, %s24
      %p52 = scmp.eq.s32.totalorder %s51, 0
      %s54 = sadd.s32 %s53, 1
      %s55 = scalar_select %p52, %s53, %s54
      %p58 = pneg %p52
      %p59 = scmp.eq.s32.totalorder %s17, 1
      %p60 = por %p58, %p59
      %p61 = scmp.ne.s32.totalorder %s53, %s56
      %p62 = scmp.eq.s32.totalorder %s17, 0
      %p63 = por %p61, %p62
      %p64 = scmp.ne.s32.totalorder %s53, %s56
      %p65 = scmp.eq.s32.totalorder %s22, 1
      %p66 = por %p64, %p65
      %p67 = scmp.ne.s32.totalorder %s56, %s57
      %p68 = scmp.eq.s32.totalorder %s22, 0
      %p69 = por %p67, %p68
      %p70 = scmp.ne.s32.totalorder %s56, %s57
      %p71 = scmp.eq.s32.totalorder %s23, 1
      %p72 = por %p70, %p71
      %p74 = scmp.ne.s32.totalorder %s57, %s73
      %p75 = scmp.eq.s32.totalorder %s23, 0
      %p76 = por %p74, %p75
      %s78 = sadd.s32 %s77, 1
      %p81 = scmp.eq.s32.totalorder %s17, 1
      %p82 = scmp.ne.s32.totalorder %s77, %s79
      %p83 = scmp.eq.s32.totalorder %s17, 0
      %p84 = por %p82, %p83
      %p85 = scmp.ne.s32.totalorder %s77, %s79
      %p86 = scmp.eq.s32.totalorder %s22, 1
      %p87 = por %p85, %p86
      %p88 = scmp.ne.s32.totalorder %s79, %s80
      %p89 = scmp.eq.s32.totalorder %s22, 0
      %p90 = por %p88, %p89
      %p91 = scmp.ne.s32.totalorder %s79, %s80
      %p92 = scmp.eq.s32.totalorder %s23, 1
      %p93 = por %p91, %p92
      %p95 = scmp.ne.s32.totalorder %s80, %s94
      %p96 = scmp.eq.s32.totalorder %s23, 0
      %p97 = por %p95, %p96
      %s99 = sadd.s32 %s98, 1
      %p102 = scmp.eq.s32.totalorder %s17, 1
      %p103 = scmp.ne.s32.totalorder %s98, %s100
      %p104 = scmp.eq.s32.totalorder %s17, 0
      %p105 = por %p103, %p104
      %p106 = scmp.ne.s32.totalorder %s98, %s100
      %p107 = scmp.eq.s32.totalorder %s22, 1
      %p108 = por %p106, %p107
      %p109 = scmp.ne.s32.totalorder %s100, %s101
      %p110 = scmp.eq.s32.totalorder %s22, 0
      %p111 = por %p109, %p110
      %p112 = scmp.ne.s32.totalorder %s100, %s101
      %p113 = scmp.eq.s32.totalorder %s23, 1
      %p114 = por %p112, %p113
      %p116 = scmp.ne.s32.totalorder %s101, %s115
      %p117 = scmp.eq.s32.totalorder %s23, 0
      %p118 = por %p116, %p117
      %s120 = sadd.s32 %s119, 1
      %p123 = scmp.eq.s32.totalorder %s17, 1
      %p124 = scmp.ne.s32.totalorder %s119, %s121
      %p125 = scmp.eq.s32.totalorder %s17, 0
      %p126 = por %p124, %p125
      %p127 = scmp.ne.s32.totalorder %s119, %s121
      %p128 = scmp.eq.s32.totalorder %s22, 1
      %p129 = por %p127, %p128
      %p130 = scmp.ne.s32.totalorder %s121, %s122
      %p131 = scmp.eq.s32.totalorder %s22, 0
      %p132 = por %p130, %p131
      %p133 = scmp.ne.s32.totalorder %s121, %s122
      %p134 = scmp.eq.s32.totalorder %s23, 1
      %p135 = por %p133, %p134
      %p137 = scmp.ne.s32.totalorder %s122, %s136
      %p138 = scmp.eq.s32.totalorder %s23, 0
      %p139 = por %p137, %p138
      %s141 = sadd.s32 %s140, 1
      %p144 = scmp.eq.s32.totalorder %s17, 1
      %p145 = scmp.ne.s32.totalorder %s140, %s142
      %p146 = scmp.eq.s32.totalorder %s17, 0
      %p147 = por %p145, %p146
      %p148 = scmp.ne.s32.totalorder %s140, %s142
      %p149 = scmp.eq.s32.totalorder %s22, 1
      %p150 = por %p148, %p149
      %p151 = scmp.ne.s32.totalorder %s142, %s143
      %p152 = scmp.eq.s32.totalorder %s22, 0
      %p153 = por %p151, %p152
      %p154 = scmp.ne.s32.totalorder %s142, %s143
      %p155 = scmp.eq.s32.totalorder %s23, 1
      %p156 = por %p154, %p155
      %p158 = scmp.ne.s32.totalorder %s143, %s157
      %p159 = scmp.eq.s32.totalorder %s23, 0
      %p160 = por %p158, %p159
      %s162 = sadd.s32 %s161, 1
      %p165 = scmp.eq.s32.totalorder %s17, 1
      %p166 = scmp.ne.s32.totalorder %s161, %s163
      %p167 = scmp.eq.s32.totalorder %s17, 0
      %p168 = por %p166, %p167
      %p169 = scmp.ne.s32.totalorder %s161, %s163
      %p170 = scmp.eq.s32.totalorder %s22, 1
      %p171 = por %p169, %p170
      %p172 = scmp.ne.s32.totalorder %s163, %s164
      %p173 = scmp.eq.s32.totalorder %s22, 0
      %p174 = por %p172, %p173
      %p175 = scmp.ne.s32.totalorder %s163, %s164
      %p176 = scmp.eq.s32.totalorder %s23, 1
      %p177 = por %p175, %p176
      %p179 = scmp.ne.s32.totalorder %s164, %s178
      %p180 = scmp.eq.s32.totalorder %s23, 0
      %p181 = por %p179, %p180
      %s183 = sadd.s32 %s182, 1
      %p186 = scmp.eq.s32.totalorder %s17, 1
      %p187 = scmp.ne.s32.totalorder %s182, %s184
      %p188 = scmp.eq.s32.totalorder %s17, 0
      %p189 = por %p187, %p188
      %p190 = scmp.ne.s32.totalorder %s182, %s184
      %p191 = scmp.eq.s32.totalorder %s22, 1
      %p192 = por %p190, %p191
      %p193 = scmp.ne.s32.totalorder %s184, %s185
      %p194 = scmp.eq.s32.totalorder %s22, 0
      %p195 = por %p193, %p194
      %p196 = scmp.ne.s32.totalorder %s184, %s185
      %p197 = scmp.eq.s32.totalorder %s23, 1
      %p198 = por %p196, %p197
      %p200 = scmp.ne.s32.totalorder %s185, %s199
      %p201 = scmp.eq.s32.totalorder %s23, 0
      %p202 = por %p200, %p201
      %s203 = ssub.s32 %s17, %s24
      %p204 = scmp.eq.s32.totalorder %s203, 0
      %s206 = sadd.s32 %s205, 1
      %s207 = scalar_select %p204, %s205, %s206
      %p210 = pneg %p204
      %p211 = scmp.eq.s32.totalorder %s17, 1
      %p212 = por %p210, %p211
      %p213 = scmp.ne.s32.totalorder %s205, %s208
      %p214 = scmp.eq.s32.totalorder %s17, 0
      %p215 = por %p213, %p214
      %p216 = scmp.ne.s32.totalorder %s205, %s208
      %p217 = scmp.eq.s32.totalorder %s22, 1
      %p218 = por %p216, %p217
      %p219 = scmp.ne.s32.totalorder %s208, %s209
      %p220 = scmp.eq.s32.totalorder %s22, 0
      %p221 = por %p219, %p220
      %p222 = scmp.ne.s32.totalorder %s208, %s209
      %p223 = scmp.eq.s32.totalorder %s23, 1
      %p224 = por %p222, %p223
      %p226 = scmp.ne.s32.totalorder %s209, %s225
      %p227 = scmp.eq.s32.totalorder %s23, 0
      %p228 = por %p226, %p227
      %p229 = scmp.le.s32.totalorder 1, %s17
      %p230 = scmp.lt.s32.totalorder %s17, 3
      %p231 = pnand %p229, %p230
      %p232 = pneg %p231
      // Predicated region
      $region9: #{conv_subsampling_forward.1} parent=5 // pred_check
        _
      $region10: #{conv_subsampling_forward.1} parent=5 // pred_check_branch
        %234 = sbr.rel (%p231) target = $region12
      $region11: #{conv_subsampling_forward.1} parent=5 // pred_region
        %s235 = ssub.s32 %s17, 1
        // Predicated region
        $region13: #{conv_subsampling_forward.1} parent=11 // pred_check
          %p236 = pneg %p90
        $region14: #{conv_subsampling_forward.1} parent=11 // pred_check_branch
          %238 = sbr.rel (%p236) target = $region16
        $region15: #{conv_subsampling_forward.1} parent=11 // pred_region
          _
        $region16: #{conv_subsampling_forward.1} parent=11 // pred_fallthru
          _
        // Predicated region
        $region17: #{conv_subsampling_forward.1} parent=11 // pred_check
          %p239 = pneg %p111
        $region18: #{conv_subsampling_forward.1} parent=11 // pred_check_branch
          %241 = sbr.rel (%p239) target = $region20
        $region19: #{conv_subsampling_forward.1} parent=11 // pred_region
          _
        $region20: #{conv_subsampling_forward.1} parent=11 // pred_fallthru
          _
        // Predicated region
        $region21: #{conv_subsampling_forward.1} parent=11 // pred_check
          %p242 = pneg %p132
        $region22: #{conv_subsampling_forward.1} parent=11 // pred_check_branch
          %244 = sbr.rel (%p242) target = $region24
        $region23: #{conv_subsampling_forward.1} parent=11 // pred_region
          _
        $region24: #{conv_subsampling_forward.1} parent=11 // pred_fallthru
          _
        // Predicated region
        $region25: #{conv_subsampling_forward.1} parent=11 // pred_check
          %p245 = pneg %p153
        $region26: #{conv_subsampling_forward.1} parent=11 // pred_check_branch
          %247 = sbr.rel (%p245) target = $region28
        $region27: #{conv_subsampling_forward.1} parent=11 // pred_region
          _
        $region28: #{conv_subsampling_forward.1} parent=11 // pred_fallthru
          _
        // Predicated region
        $region29: #{conv_subsampling_forward.1} parent=11 // pred_check
          %p248 = pneg %p174
        $region30: #{conv_subsampling_forward.1} parent=11 // pred_check_branch
          %250 = sbr.rel (%p248) target = $region32
        $region31: #{conv_subsampling_forward.1} parent=11 // pred_region
          _
        $region32: #{conv_subsampling_forward.1} parent=11 // pred_fallthru
          _
        // Predicated region
        $region33: #{conv_subsampling_forward.1} parent=11 // pred_check
          %p251 = pneg %p195
        $region34: #{conv_subsampling_forward.1} parent=11 // pred_check_branch
          %253 = sbr.rel (%p251) target = $region36
        $region35: #{conv_subsampling_forward.1} parent=11 // pred_region
          _
        $region36: #{conv_subsampling_forward.1} parent=11 // pred_fallthru
          _
      $region12: #{conv_subsampling_forward.1} parent=5 // pred_fallthru
        _
      %p254 = scmp.lt.s32.totalorder %s17, 2
      // Predicated region
      $region37: #{conv_subsampling_forward.1} parent=5 // pred_check
        %p255 = pneg %p254
      $region38: #{conv_subsampling_forward.1} parent=5 // pred_check_branch
        %257 = sbr.rel (%p255) target = $region40
      $region39: #{conv_subsampling_forward.1} parent=5 // pred_region
        // Predicated region
        $region41: #{conv_subsampling_forward.1} parent=39 // pred_check
          %p258 = pneg %p37
        $region42: #{conv_subsampling_forward.1} parent=39 // pred_check_branch
          %260 = sbr.rel (%p258) target = $region44
        $region43: #{conv_subsampling_forward.1} parent=39 // pred_region
          %p261 = scmp.lt.s32.totalorder %s17, 1
          %s262 = scalar_select %p261, %s17, 1
          %s263 = smul.addr %s262, 8
          %s264 = scalar_lea.vmem %s0, %s263
        $region44: #{conv_subsampling_forward.1} parent=39 // pred_fallthru
          _
        // Predicated region
        $region45: #{conv_subsampling_forward.1} parent=39 // pred_check
          %p265 = pneg %p63
        $region46: #{conv_subsampling_forward.1} parent=39 // pred_check_branch
          %267 = sbr.rel (%p265) target = $region48
        $region47: #{conv_subsampling_forward.1} parent=39 // pred_region
          %p268 = scmp.lt.s32.totalorder %s17, 1
          %s269 = scalar_select %p268, %s17, 1
          %s270 = smul.addr %s269, 2
          %s271 = smul.addr %s270, 8
          %s272 = scalar_lea.vmem %s1, %s271
        $region48: #{conv_subsampling_forward.1} parent=39 // pred_fallthru
          _
      $region40: #{conv_subsampling_forward.1} parent=5 // pred_fallthru
        _
      %p273 = scmp.le.s32.totalorder 1, %s17
      %p274 = scmp.lt.s32.totalorder %s17, 3
      %p275 = pnand %p273, %p274
      %p276 = pneg %p275
      // Predicated region
      $region49: #{conv_subsampling_forward.1} parent=5 // pred_check
        _
      $region50: #{conv_subsampling_forward.1} parent=5 // pred_check_branch
        %278 = sbr.rel (%p275) target = $region52
      $region51: #{conv_subsampling_forward.1} parent=5 // pred_region
        %s279 = ssub.s32 %s17, 1
        %p280 = scmp.lt.s32.totalorder %s22, 1
        %s281 = scalar_select %p280, %s22, 1
        %s282 = smul.addr %s281, 8
        %s283 = scalar_lea.vmem %s0, %s282
        %p284 = pneg %p43
        %p285 = pneg %p40
        %p286 = scmp.lt.s32.totalorder %s22, 1
        %s287 = scalar_select %p286, %s22, 1
        %s288 = smul.addr %s287, 2
        %s289 = smul.addr %s288, 8
        %s290 = scalar_lea.vmem %s1, %s289
        %p291 = pneg %p69
        %p292 = pneg %p66
        %p293 = pneg %p90
        %p294 = pneg %p87
        %p295 = pneg %p111
        %p296 = pneg %p108
        %p297 = pneg %p132
        %p298 = pneg %p129
        %p299 = pneg %p153
        %p300 = pneg %p150
        %p301 = pneg %p174
        %p302 = pneg %p171
        %p303 = pneg %p195
        %p304 = pneg %p192
        %p305 = pneg %p221
        %p306 = pneg %p218
        %s307 = sand.u32 %s208, 1
        %s308 = scalar_lea.sflag [#allocation4], %s307
        %s309 = sand.u32 %s208, 1
        %s310 = smul.addr %s309, 4
        %s311 = scalar_lea.vmem [#allocation3], %s310
        %p312 = scmp.lt.s32.totalorder %s22, 1
        %s313 = scalar_select %p312, %s22, 1
        %s314 = smul.addr %s313, 8
        %s315 = scalar_lea.vmem %s0, %s314
        %p316 = scmp.lt.s32.totalorder %s22, 1
        %s317 = scalar_select %p316, %s22, 1
        %s318 = smul.addr %s317, 2
        %s319 = smul.addr %s318, 8
        %s320 = scalar_lea.vmem %s1, %s319
        %v321 = vld [vmem:[%s315] sm:$0xff]
        %v322 = vld [vmem:[%s2] sm:$0xff]
        %v323 = vld [vmem:[%s2 + $0x8] sm:$0xff]
        %v324 = vld [vmem:[%s2 + $0x10] sm:$0xff]
        %v325 = vld [vmem:[%s2 + $0x18] sm:$0xff]
        %v326 = vld [vmem:[%s2 + $0x20] sm:$0xff]
        %v327 = vld [vmem:[%s2 + $0x28] sm:$0xff]
        %v328 = vld [vmem:[%s2 + $0x30] sm:$0x3f]
        %v329 = vld [vmem:[%s3] sm:$0x1]
        %v331 = vlaneseq
        %v332 = vshrl.u32 %v331, 7
        %v333 = vsub.s32 0, %v332
        %v334 = vrot.slane %v329, %v333
        %vm336 = vcmask 441344
        %v338 = vsel %vm336, %v321, 0
        %vm340 = vcmask 1045504
        %v342 = vsel %vm340, %v328, 0
        %344 = vmatprep.subr.mxu0 0.0
        %345 = vmatpush1.msra.mxu0 %v322
        %346 = vmatprep.subr.mxu0 0.0
        %347 = vmatpush1.msra.mxu0 %v323
        %348 = vmatprep.subr.mxu0 0.0
        %349 = vmatpush1.msra.mxu0 %v324
        %350 = vmatprep.subr.mxu0 0.0
        %351 = vmatpush1.msra.mxu0 %v325
        %352 = vmatprep.subr.mxu0 0.0
        %353 = vmatpush1.msra.mxu0 %v326
        %354 = vmatprep.subr.mxu0 0.0
        %355 = vmatpush1.msra.mxu0 %v327
        %356 = vmatprep.subr.mxu0 0.0
        %357 = vmatpush1.msra.mxu0 %v342
        %358 = vmatprep.subr.mxu0 0.0
        %359 = vmatpush1.msra.mxu0 0.0
        %360 = vmatprep.subr.mxu0 0.0
        %361 = vmatpush1.msra.mxu0 0.0
        %362 = vmatprep.subr.mxu0 0.0
        %363 = vmatpush1.msra.mxu0 0.0
        %364 = vmatprep.subr.mxu0 0.0
        %365 = vmatpush1.msra.mxu0 0.0
        %366 = vmatprep.subr.mxu0 0.0
        %367 = vmatpush1.msra.mxu0 0.0
        %368 = vmatprep.subr.mxu0 0.0
        %369 = vmatpush1.msra.mxu0 0.0
        %370 = vmatprep.subr.mxu0 0.0
        %371 = vmatpush1.msra.mxu0 0.0
        %372 = vmatprep.subr.mxu0 0.0
        %373 = vmatpush1.msra.mxu0 0.0
        %374 = vmatprep.subr.mxu0 0.0
        %375 = vmatpush1.msra.mxu0 0.0
        %376 = vmatprep.subr.mxu0 0.0
        %377 = vmatpush1.msra.mxu0 0.0
        %378 = vmatprep.subr.mxu0 0.0
        %379 = vmatpush1.msra.mxu0 0.0
        %380 = vmatprep.subr.mxu0 0.0
        %381 = vmatpush1.msra.mxu0 0.0
        %382 = vmatprep.subr.mxu0 0.0
        %383 = vmatpush1.msra.mxu0 0.0
        %384 = vmatprep.subr.mxu0 0.0
        %385 = vmatpush1.msra.mxu0 0.0
        %386 = vmatprep.subr.mxu0 0.0
        %387 = vmatpush1.msra.mxu0 0.0
        %388 = vmatprep.subr.mxu0 0.0
        %389 = vmatpush1.msra.mxu0 0.0
        %390 = vmatprep.subr.mxu0 0.0
        %391 = vmatpush1.msra.mxu0 0.0
        %392 = vmatprep.subr.mxu0 0.0
        %393 = vmatpush1.msra.mxu0 0.0
        %394 = vmatprep.subr.mxu0 0.0
        %395 = vmatpush1.msra.mxu0 0.0
        %396 = vmatprep.subr.mxu0 0.0
        %397 = vmatpush1.msra.mxu0 0.0
        %398 = vmatprep.subr.mxu0 0.0
        %399 = vmatpush1.msra.mxu0 0.0
        %400 = vmatprep.subr.mxu0 0.0
        %401 = vmatpush1.msra.mxu0 0.0
        %402 = vmatprep.subr.mxu0 0.0
        %403 = vmatpush1.msra.mxu0 0.0
        %404 = vmatprep.subr.mxu0 0.0
        %405 = vmatpush1.msra.mxu0 0.0
        %406 = vmatprep.subr.mxu0 0.0
        %407 = vmatpush1.msra.mxu0 0.0
        %408 = vmatprep.mubr.f32.mxu0 0.0
        %409 = vmatmul.mubr.f32.gmra.mrb[0].mxu0 %v338
        %v410 = vpop.f32.mrb[0].mxu0
        %v411 = vadd.f32 %v334, %v410
        %v412 = vpop.f32.mrb[0].mxu0
        %413 = vdwg.mxu0
        %v414 = vmax.f32 %v411, 0.0
        %v415 = vld [vmem:[%s320] sm:$0xff]
        %417 = vset.pattern.permute.xlu0 0
        %418 = vperm.xlu0 %417, %v415
        %v419 = vpop.permute.xlu0 %418
        %v421 = vmul.f32 %v414, %v419
        %vm422 = vcmask 253952
        %423 = vst.msk [vmem:[#allocation2] sm:$0x1] %vm422, 0.0
        %vm424 = vcmask 260100
        %425 = vst.msk [vmem:[#allocation2 - $0x3] sm:$0x70] %vm424, %v421
        %v426 = vld [vmem:[#allocation2] sm:$0xf]
        %v427 = vld [vmem:[%s320 + $0xc] sm:$0xf]
        %429 = vset.pattern.permute.xlu0 0
        %430 = vperm.xlu0 %429, %v427
        %v431 = vpop.permute.xlu0 %430
        %v433 = vmul.f32 %v426, %v431
        %v434 = vld [vmem:[%s4] sm:$0xff]
        %v435 = vld [vmem:[%s4 + $0x8] sm:$0xff]
        %v436 = vld [vmem:[%s4 + $0x10] sm:$0xff]
        %v437 = vld [vmem:[%s4 + $0x18] sm:$0xff]
        %s438 = scalar_lea.vmem %s4, 32
        %v439 = vld [vmem:[%s438] sm:$0xff]
        %v440 = vld [vmem:[%s438 + $0x8] sm:$0xff]
        %v441 = vld [vmem:[%s438 + $0x10] sm:$0xff]
        %v442 = vld [vmem:[%s438 + $0x18] sm:$0xff]
        %vm443 = vcmask 261120
        %v445 = vsel %vm443, %v421, 0
        %447 = vmatprep.subr.mxu0 0.0
        %448 = vmatpush1.msra.mxu0 %v439
        %449 = vmatprep.subr.mxu0 0.0
        %450 = vmatpush1.msra.mxu0 %v440
        %451 = vmatprep.subr.mxu0 0.0
        %452 = vmatpush1.msra.mxu0 %v441
        %453 = vmatprep.subr.mxu0 0.0
        %454 = vmatpush1.msra.mxu0 %v442
        %455 = vmatprep.subr.mxu0 0.0
        %456 = vmatpush1.msra.mxu0 0.0
        %457 = vmatprep.subr.mxu0 0.0
        %458 = vmatpush1.msra.mxu0 0.0
        %459 = vmatprep.subr.mxu0 0.0
        %460 = vmatpush1.msra.mxu0 0.0
        %461 = vmatprep.subr.mxu0 0.0
        %462 = vmatpush1.msra.mxu0 0.0
        %463 = vmatprep.subr.mxu0 0.0
        %464 = vmatpush1.msra.mxu0 0.0
        %465 = vmatprep.subr.mxu0 0.0
        %466 = vmatpush1.msra.mxu0 0.0
        %467 = vmatprep.subr.mxu0 0.0
        %468 = vmatpush1.msra.mxu0 0.0
        %469 = vmatprep.subr.mxu0 0.0
        %470 = vmatpush1.msra.mxu0 0.0
        %471 = vmatprep.subr.mxu0 0.0
        %472 = vmatpush1.msra.mxu0 0.0
        %473 = vmatprep.subr.mxu0 0.0
        %474 = vmatpush1.msra.mxu0 0.0
        %475 = vmatprep.subr.mxu0 0.0
        %476 = vmatpush1.msra.mxu0 0.0
        %477 = vmatprep.subr.mxu0 0.0
        %478 = vmatpush1.msra.mxu0 0.0
        %479 = vmatprep.subr.mxu0 0.0
        %480 = vmatpush1.msra.mxu0 0.0
        %481 = vmatprep.subr.mxu0 0.0
        %482 = vmatpush1.msra.mxu0 0.0
        %483 = vmatprep.subr.mxu0 0.0
        %484 = vmatpush1.msra.mxu0 0.0
        %485 = vmatprep.subr.mxu0 0.0
        %486 = vmatpush1.msra.mxu0 0.0
        %487 = vmatprep.subr.mxu0 0.0
        %488 = vmatpush1.msra.mxu0 0.0
        %489 = vmatprep.subr.mxu0 0.0
        %490 = vmatpush1.msra.mxu0 0.0
        %491 = vmatprep.subr.mxu0 0.0
        %492 = vmatpush1.msra.mxu0 0.0
        %493 = vmatprep.subr.mxu0 0.0
        %494 = vmatpush1.msra.mxu0 0.0
        %495 = vmatprep.subr.mxu0 0.0
        %496 = vmatpush1.msra.mxu0 0.0
        %497 = vmatprep.subr.mxu0 0.0
        %498 = vmatpush1.msra.mxu0 0.0
        %499 = vmatprep.subr.mxu0 0.0
        %500 = vmatpush1.msra.mxu0 0.0
        %501 = vmatprep.subr.mxu0 0.0
        %502 = vmatpush1.msra.mxu0 0.0
        %503 = vmatprep.subr.mxu0 0.0
        %504 = vmatpush1.msra.mxu0 0.0
        %505 = vmatprep.subr.mxu0 0.0
        %506 = vmatpush1.msra.mxu0 0.0
        %507 = vmatprep.subr.mxu0 0.0
        %508 = vmatpush1.msra.mxu0 0.0
        %509 = vmatprep.subr.mxu0 0.0
        %510 = vmatpush1.msra.mxu0 0.0
        %511 = vmatprep.mubr.f32.mxu0 0.0
        %512 = vmatmul.mubr.f32.gmra.mrb[0].mxu0 %v445
        %v513 = vpop.f32.mrb[0].mxu0
        %v514 = vadd.f32 0.0, %v513
        %v515 = vpop.f32.mrb[0].mxu0
        %516 = vdwg.mxu0
        %v518 = vsel %vm443, %v433, 0
        %520 = vmatprep.subr.mxu0 0.0
        %521 = vmatpush1.msra.mxu0 %v434
        %522 = vmatprep.subr.mxu0 0.0
        %523 = vmatpush1.msra.mxu0 %v435
        %524 = vmatprep.subr.mxu0 0.0
        %525 = vmatpush1.msra.mxu0 %v436
        %526 = vmatprep.subr.mxu0 0.0
        %527 = vmatpush1.msra.mxu0 %v437
        %528 = vmatprep.subr.mxu0 0.0
        %529 = vmatpush1.msra.mxu0 0.0
        %530 = vmatprep.subr.mxu0 0.0
        %531 = vmatpush1.msra.mxu0 0.0
        %532 = vmatprep.subr.mxu0 0.0
        %533 = vmatpush1.msra.mxu0 0.0
        %534 = vmatprep.subr.mxu0 0.0
        %535 = vmatpush1.msra.mxu0 0.0
        %536 = vmatprep.subr.mxu0 0.0
        %537 = vmatpush1.msra.mxu0 0.0
        %538 = vmatprep.subr.mxu0 0.0
        %539 = vmatpush1.msra.mxu0 0.0
        %540 = vmatprep.subr.mxu0 0.0
        %541 = vmatpush1.msra.mxu0 0.0
        %542 = vmatprep.subr.mxu0 0.0
        %543 = vmatpush1.msra.mxu0 0.0
        %544 = vmatprep.subr.mxu0 0.0
        %545 = vmatpush1.msra.mxu0 0.0
        %546 = vmatprep.subr.mxu0 0.0
        %547 = vmatpush1.msra.mxu0 0.0
        %548 = vmatprep.subr.mxu0 0.0
        %549 = vmatpush1.msra.mxu0 0.0
        %550 = vmatprep.subr.mxu0 0.0
        %551 = vmatpush1.msra.mxu0 0.0
        %552 = vmatprep.subr.mxu0 0.0
        %553 = vmatpush1.msra.mxu0 0.0
        %554 = vmatprep.subr.mxu0 0.0
        %555 = vmatpush1.msra.mxu0 0.0
        %556 = vmatprep.subr.mxu0 0.0
        %557 = vmatpush1.msra.mxu0 0.0
        %558 = vmatprep.subr.mxu0 0.0
        %559 = vmatpush1.msra.mxu0 0.0
        %560 = vmatprep.subr.mxu0 0.0
        %561 = vmatpush1.msra.mxu0 0.0
        %562 = vmatprep.subr.mxu0 0.0
        %563 = vmatpush1.msra.mxu0 0.0
        %564 = vmatprep.subr.mxu0 0.0
        %565 = vmatpush1.msra.mxu0 0.0
        %566 = vmatprep.subr.mxu0 0.0
        %567 = vmatpush1.msra.mxu0 0.0
        %568 = vmatprep.subr.mxu0 0.0
        %569 = vmatpush1.msra.mxu0 0.0
        %570 = vmatprep.subr.mxu0 0.0
        %571 = vmatpush1.msra.mxu0 0.0
        %572 = vmatprep.subr.mxu0 0.0
        %573 = vmatpush1.msra.mxu0 0.0
        %574 = vmatprep.subr.mxu0 0.0
        %575 = vmatpush1.msra.mxu0 0.0
        %576 = vmatprep.subr.mxu0 0.0
        %577 = vmatpush1.msra.mxu0 0.0
        %578 = vmatprep.subr.mxu0 0.0
        %579 = vmatpush1.msra.mxu0 0.0
        %580 = vmatprep.subr.mxu0 0.0
        %581 = vmatpush1.msra.mxu0 0.0
        %582 = vmatprep.subr.mxu0 0.0
        %583 = vmatpush1.msra.mxu0 0.0
        %584 = vmatprep.mubr.f32.mxu0 0.0
        %585 = vmatmul.mubr.f32.gmra.mrb[0].mxu0 %v518
        %v586 = vpop.f32.mrb[0].mxu0
        %v587 = vadd.f32 %v514, %v586
        %v588 = vpop.f32.mrb[0].mxu0
        %589 = vdwg.mxu0
        %s590 = scalar_lea.vmem %s4, 64
        %v591 = vld [vmem:[%s590] sm:$0xff]
        %v592 = vld [vmem:[%s590 + $0x8] sm:$0xff]
        %v593 = vld [vmem:[%s590 + $0x10] sm:$0xff]
        %v594 = vld [vmem:[%s590 + $0x18] sm:$0xff]
        %v595 = vrot.slane %v421, 4
        %v596 = vsel %vm443, %v595, 0
        %598 = vmatprep.subr.mxu0 0.0
        %599 = vmatpush1.msra.mxu0 %v591
        %600 = vmatprep.subr.mxu0 0.0
        %601 = vmatpush1.msra.mxu0 %v592
        %602 = vmatprep.subr.mxu0 0.0
        %603 = vmatpush1.msra.mxu0 %v593
        %604 = vmatprep.subr.mxu0 0.0
        %605 = vmatpush1.msra.mxu0 %v594
        %606 = vmatprep.subr.mxu0 0.0
        %607 = vmatpush1.msra.mxu0 0.0
        %608 = vmatprep.subr.mxu0 0.0
        %609 = vmatpush1.msra.mxu0 0.0
        %610 = vmatprep.subr.mxu0 0.0
        %611 = vmatpush1.msra.mxu0 0.0
        %612 = vmatprep.subr.mxu0 0.0
        %613 = vmatpush1.msra.mxu0 0.0
        %614 = vmatprep.subr.mxu0 0.0
        %615 = vmatpush1.msra.mxu0 0.0
        %616 = vmatprep.subr.mxu0 0.0
        %617 = vmatpush1.msra.mxu0 0.0
        %618 = vmatprep.subr.mxu0 0.0
        %619 = vmatpush1.msra.mxu0 0.0
        %620 = vmatprep.subr.mxu0 0.0
        %621 = vmatpush1.msra.mxu0 0.0
        %622 = vmatprep.subr.mxu0 0.0
        %623 = vmatpush1.msra.mxu0 0.0
        %624 = vmatprep.subr.mxu0 0.0
        %625 = vmatpush1.msra.mxu0 0.0
        %626 = vmatprep.subr.mxu0 0.0
        %627 = vmatpush1.msra.mxu0 0.0
        %628 = vmatprep.subr.mxu0 0.0
        %629 = vmatpush1.msra.mxu0 0.0
        %630 = vmatprep.subr.mxu0 0.0
        %631 = vmatpush1.msra.mxu0 0.0
        %632 = vmatprep.subr.mxu0 0.0
        %633 = vmatpush1.msra.mxu0 0.0
        %634 = vmatprep.subr.mxu0 0.0
        %635 = vmatpush1.msra.mxu0 0.0
        %636 = vmatprep.subr.mxu0 0.0
        %637 = vmatpush1.msra.mxu0 0.0
        %638 = vmatprep.subr.mxu0 0.0
        %639 = vmatpush1.msra.mxu0 0.0
        %640 = vmatprep.subr.mxu0 0.0
        %641 = vmatpush1.msra.mxu0 0.0
        %642 = vmatprep.subr.mxu0 0.0
        %643 = vmatpush1.msra.mxu0 0.0
        %644 = vmatprep.subr.mxu0 0.0
        %645 = vmatpush1.msra.mxu0 0.0
        %646 = vmatprep.subr.mxu0 0.0
        %647 = vmatpush1.msra.mxu0 0.0
        %648 = vmatprep.subr.mxu0 0.0
        %649 = vmatpush1.msra.mxu0 0.0
        %650 = vmatprep.subr.mxu0 0.0
        %651 = vmatpush1.msra.mxu0 0.0
        %652 = vmatprep.subr.mxu0 0.0
        %653 = vmatpush1.msra.mxu0 0.0
        %654 = vmatprep.subr.mxu0 0.0
        %655 = vmatpush1.msra.mxu0 0.0
        %656 = vmatprep.subr.mxu0 0.0
        %657 = vmatpush1.msra.mxu0 0.0
        %658 = vmatprep.subr.mxu0 0.0
        %659 = vmatpush1.msra.mxu0 0.0
        %660 = vmatprep.subr.mxu0 0.0
        %661 = vmatpush1.msra.mxu0 0.0
        %662 = vmatprep.mubr.f32.mxu0 0.0
        %663 = vmatmul.mubr.f32.gmra.mrb[0].mxu0 %v596
        %v664 = vpop.f32.mrb[0].mxu0
        %v665 = vadd.f32 0.0, %v664
        %v666 = vpop.f32.mrb[0].mxu0
        %667 = vdwg.mxu0
        %v668 = vadd.f32 %v587, %v665
        %v669 = vld [vmem:[%s5] sm:$0x1]
        %v671 = vlaneseq
        %v672 = vshrl.u32 %v671, 7
        %v673 = vsub.s32 0, %v672
        %v674 = vrot.slane %v669, %v673
        %v676 = vadd.f32 %v668, %v674
        %v677 = vmax.f32 %v676, 0.0
        %v678 = vld [vmem:[%s320 + $0x8] sm:$0xf]
        %680 = vset.pattern.permute.xlu0 0
        %681 = vperm.xlu0 %680, %v678
        %v682 = vpop.permute.xlu0 %681
        %v684 = vmul.f32 %v677, %v682
        %v685 = vld [vmem:[%s6] sm:$0xff]
        %v686 = vld [vmem:[%s6 + $0x8] sm:$0xff]
        %v687 = vld [vmem:[%s7] sm:$0x1]
        %v689 = vlaneseq
        %v690 = vshrl.u32 %v689, 7
        %v691 = vsub.s32 0, %v690
        %v692 = vrot.slane %v687, %v691
        %vm694 = vcmask 130048
        %v696 = vsel %vm694, %v684, 0
        %698 = vmatprep.subr.mxu0 0.0
        %699 = vmatpush1.msra.mxu0 %v685
        %700 = vmatprep.subr.mxu0 0.0
        %701 = vmatpush1.msra.mxu0 %v686
        %702 = vmatprep.subr.mxu0 0.0
        %703 = vmatpush1.msra.mxu0 0.0
        %704 = vmatprep.subr.mxu0 0.0
        %705 = vmatpush1.msra.mxu0 0.0
        %706 = vmatprep.subr.mxu0 0.0
        %707 = vmatpush1.msra.mxu0 0.0
        %708 = vmatprep.subr.mxu0 0.0
        %709 = vmatpush1.msra.mxu0 0.0
        %710 = vmatprep.subr.mxu0 0.0
        %711 = vmatpush1.msra.mxu0 0.0
        %712 = vmatprep.subr.mxu0 0.0
        %713 = vmatpush1.msra.mxu0 0.0
        %714 = vmatprep.subr.mxu0 0.0
        %715 = vmatpush1.msra.mxu0 0.0
        %716 = vmatprep.subr.mxu0 0.0
        %717 = vmatpush1.msra.mxu0 0.0
        %718 = vmatprep.subr.mxu0 0.0
        %719 = vmatpush1.msra.mxu0 0.0
        %720 = vmatprep.subr.mxu0 0.0
        %721 = vmatpush1.msra.mxu0 0.0
        %722 = vmatprep.subr.mxu0 0.0
        %723 = vmatpush1.msra.mxu0 0.0
        %724 = vmatprep.subr.mxu0 0.0
        %725 = vmatpush1.msra.mxu0 0.0
        %726 = vmatprep.subr.mxu0 0.0
        %727 = vmatpush1.msra.mxu0 0.0
        %728 = vmatprep.subr.mxu0 0.0
        %729 = vmatpush1.msra.mxu0 0.0
        %730 = vmatprep.subr.mxu0 0.0
        %731 = vmatpush1.msra.mxu0 0.0
        %732 = vmatprep.subr.mxu0 0.0
        %733 = vmatpush1.msra.mxu0 0.0
        %734 = vmatprep.subr.mxu0 0.0
        %735 = vmatpush1.msra.mxu0 0.0
        %736 = vmatprep.subr.mxu0 0.0
        %737 = vmatpush1.msra.mxu0 0.0
        %738 = vmatprep.subr.mxu0 0.0
        %739 = vmatpush1.msra.mxu0 0.0
        %740 = vmatprep.subr.mxu0 0.0
        %741 = vmatpush1.msra.mxu0 0.0
        %742 = vmatprep.subr.mxu0 0.0
        %743 = vmatpush1.msra.mxu0 0.0
        %744 = vmatprep.subr.mxu0 0.0
        %745 = vmatpush1.msra.mxu0 0.0
        %746 = vmatprep.subr.mxu0 0.0
        %747 = vmatpush1.msra.mxu0 0.0
        %748 = vmatprep.subr.mxu0 0.0
        %749 = vmatpush1.msra.mxu0 0.0
        %750 = vmatprep.subr.mxu0 0.0
        %751 = vmatpush1.msra.mxu0 0.0
        %752 = vmatprep.subr.mxu0 0.0
        %753 = vmatpush1.msra.mxu0 0.0
        %754 = vmatprep.subr.mxu0 0.0
        %755 = vmatpush1.msra.mxu0 0.0
        %756 = vmatprep.subr.mxu0 0.0
        %757 = vmatpush1.msra.mxu0 0.0
        %758 = vmatprep.subr.mxu0 0.0
        %759 = vmatpush1.msra.mxu0 0.0
        %760 = vmatprep.subr.mxu0 0.0
        %761 = vmatpush1.msra.mxu0 0.0
        %762 = vmatprep.mubr.f32.mxu0 0.0
        %763 = vmatmul.mubr.f32.gmra.mrb[0].mxu0 %v696
        %v764 = vpop.f32.mrb[0].mxu0
        %v765 = vadd.f32 %v692, %v764
        %v766 = vpop.f32.mrb[0].mxu0
        %767 = vdwg.mxu0
        %vm768 = vcmask 257024
        %769 = vst.msk [vmem:[%s311] sm:$0xf] %vm768, %v765
        %s770 = sand.u32 %s208, 1
        %s771 = scalar_lea.sflag [#allocation4], %s770
        %s772 = sand.u32 %s208, 1
        %s773 = smul.addr %s772, 4
        %s774 = scalar_lea.vmem [#allocation3], %s773
        // Predicated region
        $region53: #{conv_subsampling_forward.1} parent=51 // pred_check
          %p775 = pneg %p218
        $region54: #{conv_subsampling_forward.1} parent=51 // pred_check_branch
          %777 = sbr.rel (%p775) target = $region56
        $region55: #{conv_subsampling_forward.1} parent=51 // pred_region
          %s779 = ssub.s32 64, 64
          %780 = vsyncadd %s771, %s779
          %s781 = smul.addr %s22, 64
          %s782 = scalar_lea.hbm %s8, %s781
          %s784 = sshll.u32 %s774, 4
          %s785 = int_to_ptr.vmem [resolvable:$true] %s784
          %787 = dma.vmem_to_hbm [thread:$0]  %s785, 64, %s782, %s771
        $region56: #{conv_subsampling_forward.1} parent=51 // pred_fallthru
          _
      $region52: #{conv_subsampling_forward.1} parent=5 // pred_fallthru
        _
      %p788 = scmp.le.s32.totalorder 2, %s17
      // Predicated region
      $region57: #{conv_subsampling_forward.1} parent=5 // pred_check
        %p789 = pneg %p788
      $region58: #{conv_subsampling_forward.1} parent=5 // pred_check_branch
        %791 = sbr.rel (%p789) target = $region60
      $region59: #{conv_subsampling_forward.1} parent=5 // pred_region
        %s792 = ssub.s32 %s17, 2
        // Predicated region
        $region61: #{conv_subsampling_forward.1} parent=59 // pred_check
          %p793 = pneg %p224
        $region62: #{conv_subsampling_forward.1} parent=59 // pred_check_branch
          %795 = sbr.rel (%p793) target = $region64
        $region63: #{conv_subsampling_forward.1} parent=59 // pred_region
          %s796 = sand.u32 %s209, 1
          %s797 = scalar_lea.sflag [#allocation4], %s796
          %s798 = sand.u32 %s209, 1
          %s799 = smul.addr %s798, 4
          %s800 = scalar_lea.vmem [#allocation3], %s799
          %801 = dma.done %s797, 64
        $region64: #{conv_subsampling_forward.1} parent=59 // pred_fallthru
          _
      $region60: #{conv_subsampling_forward.1} parent=5 // pred_fallthru
        _
    $region6: #{conv_subsampling_forward.1} parent=1 // loop_footer
      %s21 = sadd.s32 1, %s17
    $region7: #{conv_subsampling_forward.1} parent=1 // loop_footer_branch
      %16 = sbr.rel target = $region3
    $region8: #{conv_subsampling_forward.1} parent=1 // loop_exit
      _
    %802 = vsyncpa [#allocation4], 1
    %s803 = scalar_lea.sflag [#allocation4], 1
    %804 = vsyncpa %s803, 1

</llo_original>
